<compile_context>
chip_gen: v6e
topology: v6e:2x2x1
jax: 0.10.0
libtpu: 0.0.40
codegen_flags: <defaults>
</compile_context>

<pallas_src>
import jax
import jax.numpy as jnp
from jax.experimental import pallas as pl
from jax.experimental.pallas import tpu as pltpu


def _relative_position_index(h, w):
    """Identical arithmetic to the PyTorch __init__ buffer. Shape (h*w, h*w), int32."""
    ch = jnp.arange(h)
    cw = jnp.arange(w)
    coords = jnp.stack(jnp.meshgrid(ch, cw, indexing="ij"))           # (2, h, w)
    cf = coords.reshape(2, -1)                                        # (2, h*w)
    rel = cf[:, :, None] - cf[:, None, :]                             # (2, hw, hw)
    rel = jnp.transpose(rel, (1, 2, 0))                               # (hw, hw, 2)
    rel = rel.at[:, :, 0].add(h - 1)
    rel = rel.at[:, :, 1].add(w - 1)
    rel = rel.at[:, :, 0].multiply(2 * h - 1)
    return rel.sum(-1).astype(jnp.int32)                              # (hw, hw)


def _rpb_kernel_factory(hb, rh):
    def kernel(g_ref, o_ref):
        # g_ref: (1, h, WF)      -- whole per-head pre-tiled bias (VMEM-resident
        #                           across ib steps: its block index ignores ib)
        # o_ref: (1, hb, rh, WF) -- expanded output block, final contiguous layout
        ib = pl.program_id(1)
        row0 = pl.multiple_of(ib * hb, hb)
        g = g_ref[0, pl.ds(row0, hb), :].astype(o_ref.dtype)          # (hb, WF)
        # H-direction repeat_interleave == rh identical row-band copies.
        # Per-rh stores keep the live working set at ~hb vregs.
        for r in range(rh):
            o_ref[0, :, r, :] = g

    return kernel


def relative_position_bias(table, h, w, H, W, *, hb=None, out_dtype=None,
                           block_bytes=4 * 1024 * 1024):
    """table: ((2h-1)*(2w-1), num_heads).  Returns (1, num_heads, H*W, h*w)."""
    assert H % h == 0 and W % w == 0, "H/W must be multiples of h/w (as in PyTorch module)"
    _, nh = table.shape
    rh, rw = H // h, W // w
    hw = h * w
    WF = w * rw * hw                                                   # folded minor dim
    out_dtype = table.dtype if out_dtype is None else jnp.dtype(out_dtype)

    # ---- KiB-scale wrapper-side prep (independent of H*W bandwidth cost) ----
    idx = _relative_position_index(h, w)                               # (hw, hw)
    bias = table[idx.reshape(-1)].reshape(h, w, hw, nh)                # (h, w, hw, nh)
    g4 = jnp.transpose(bias, (3, 0, 1, 2))                             # (nh, h, w, hw)
    if rw > 1:
        # W-direction repeat_interleave == block-repeat along the minor axis
        # for this flattening; done once here instead of every grid step.
        g4 = jnp.concatenate([g4] * rw, axis=-1)                       # (nh, h, w, rw*hw)
    g3 = g4.reshape(nh, h, WF).astype(out_dtype)                       # (nh, h, WF)

    # ---- block / grid selection ----
    itemsize = jnp.dtype(out_dtype).itemsize
    row_out_bytes = rh * WF * itemsize                                 # output bytes per source row
    if hb is None:
        hb = max(1, min(h, block_bytes // max(1, row_out_bytes)))
        while h % hb:
            hb -= 1
    # v7x megacore: expose >= 2 parallel blocks when the head axis alone can't.
    if nh * (h // hb) < 2 and h > 1:
        hb = h // 2
        while h % hb:
            hb -= 1
    grid = (nh, h // hb)

    kernel = _rpb_kernel_factory(hb, rh)

    out_bytes = nh * h * rh * WF * itemsize
    in_bytes = g3.size * g3.dtype.itemsize

    # (nh, h, rh, WF) is contiguous-layout-identical to (1, nh, H*W, h*w).
    out4 = pl.pallas_call(
        kernel,
        out_shape=jax.ShapeDtypeStruct((nh, h, rh, WF), out_dtype),
        grid_spec=pltpu.PrefetchScalarGridSpec(
            num_scalar_prefetch=0,
            grid=grid,
            in_specs=[
                # whole per-head block; index ignores ib -> resident across row bands
                pl.BlockSpec((1, h, WF), lambda n, ib: (n, 0, 0)),
            ],
            out_specs=pl.BlockSpec((1, hb, rh, WF), lambda n, ib: (n, ib, 0, 0)),
        ),
        compiler_params=pltpu.CompilerParams(
            dimension_semantics=("parallel", "parallel"),
            vmem_limit_bytes=32 * 1024 * 1024,
        ),
        cost_estimate=pl.CostEstimate(
            flops=0, transcendentals=0, bytes_accessed=out_bytes + in_bytes),
    )(g3)

    return out4.reshape(1, nh, H * W, hw)


def _reference(table, h, w, nh, H, W):
    """Pure-JAX mirror of the PyTorch forward."""
    idx = _relative_position_index(h, w)
    bias = table[idx.reshape(-1)].reshape(h, w, h * w, nh)
    bias = jnp.repeat(bias, H // h, axis=0)
    bias = jnp.repeat(bias, W // w, axis=1)
    bias = bias.reshape(H * W, h * w, nh)
    return jnp.transpose(bias, (2, 0, 1))[None]                        # (1, nh, H*W, h*w)


if __name__ == "__main__":
    num_heads, h, w = 4, 8, 8       # module config
    H, W = 16, 16                   # forward(H, W)

    key = jax.random.PRNGKey(0)
    table = jax.random.normal(
        key, ((2 * h - 1) * (2 * w - 1), num_heads), dtype=jnp.float32) * 0.02

    out = relative_position_bias(table, h, w, H, W)
    out = jax.block_until_ready(out)

    ref = jax.block_until_ready(_reference(table, h, w, num_heads, H, W))
    assert out.shape == (1, num_heads, H * W, h * w), out.shape
    assert jnp.allclose(out, ref, atol=1e-6, rtol=1e-6), "mismatch vs reference"

    print("KERNEL_OK")
</pallas_src>

<mosaic_0001>
module attributes {stable_mosaic.version = 11 : i64} {
  func.func @kernel(%arg0: i32, %arg1: i32, %arg2: memref<1x8x1024xf32, #tpu.memory_space<vmem>>, %arg3: memref<1x8x2x1024xf32, #tpu.memory_space<vmem>>) attributes {dimension_semantics = [#tpu.dimension_semantics<parallel>, #tpu.dimension_semantics<parallel>], iteration_bounds = array<i64: 4, 1>, scalar_prefetch = 0 : i64, scratch_operands = 0 : i64, tpu.core_type = #tpu.core_type<tc>, window_params = [{transform_indices = @transform_0, window_bounds = array<i64: 1, 8, 1024>}, {transform_indices = @transform_1, window_bounds = array<i64: 1, 8, 2, 1024>}]} {
    %c8_i32 = arith.constant 8 : i32
    %0 = arith.muli %arg1, %c8_i32 : i32
    %1 = tpu.assume_multiple %0, 8 : i32
    %c0 = arith.constant 0 : index
    %2 = arith.index_cast %1 : i32 to index
    %c0_0 = arith.constant 0 : index
    %3 = vector.load %arg2[%c0, %2, %c0_0] : memref<1x8x1024xf32, #tpu.memory_space<vmem>>, vector<1x8x1024xf32>
    %4 = vector.shape_cast %3 : vector<1x8x1024xf32> to vector<8x1024xf32>
    %c0_1 = arith.constant 0 : index
    %c0_2 = arith.constant 0 : index
    %c0_3 = arith.constant 0 : index
    %c0_4 = arith.constant 0 : index
    %5 = vector.load %arg3[%c0_1, %c0_2, %c0_3, %c0_4] : memref<1x8x2x1024xf32, #tpu.memory_space<vmem>>, vector<1x8x1x1024xf32>
    %6 = vector.shape_cast %5 : vector<1x8x1x1024xf32> to vector<8x1024xf32>
    %7 = vector.shape_cast %4 : vector<8x1024xf32> to vector<1x8x1x1024xf32>
    tpu.vector_store %arg3[%c0_1, %c0_2, %c0_3, %c0_4], %7 {strides = array<i32>} : memref<1x8x2x1024xf32, #tpu.memory_space<vmem>>, vector<1x8x1x1024xf32>,
    %c0_5 = arith.constant 0 : index
    %c0_6 = arith.constant 0 : index
    %c1 = arith.constant 1 : index
    %c0_7 = arith.constant 0 : index
    %8 = vector.load %arg3[%c0_5, %c0_6, %c1, %c0_7] : memref<1x8x2x1024xf32, #tpu.memory_space<vmem>>, vector<1x8x1x1024xf32>
    %9 = vector.shape_cast %8 : vector<1x8x1x1024xf32> to vector<8x1024xf32>
    %10 = vector.shape_cast %4 : vector<8x1024xf32> to vector<1x8x1x1024xf32>
    tpu.vector_store %arg3[%c0_5, %c0_6, %c1, %c0_7], %10 {strides = array<i32>} : memref<1x8x2x1024xf32, #tpu.memory_space<vmem>>, vector<1x8x1x1024xf32>,
    return
  }
  func.func @transform_0(%arg0: i32, %arg1: i32) -> (i32, i32, i32) {
    %c0_i32 = arith.constant 0 : i32
    %c0_i32_0 = arith.constant 0 : i32
    %c0_i32_1 = arith.constant 0 : i32
    return %arg0, %c0_i32, %c0_i32_0 : i32, i32, i32
  }
  func.func @transform_1(%arg0: i32, %arg1: i32) -> (i32, i32, i32, i32) {
    %c0_i32 = arith.constant 0 : i32
    %c0_i32_0 = arith.constant 0 : i32
    %c0_i32_1 = arith.constant 0 : i32
    return %arg0, %arg1, %c0_i32, %c0_i32_0 : i32, i32, i32, i32
  }
}

</mosaic_0001>

<llo_original>
// kernel: tpu_custom_call.1
$region0: #{tpu_custom_call.1}
  #allocation0 [shape = 'u32[]', space=smem, size = 0x4, offset = 0x4, fixed_abs, tag = 'smem constant byte address 0x4 - core index']
  #allocation1 [shape = 'u32[144,128]{1,0:T(1,128)}', space=vmem, size = 0x12000, scoped, tag = 'internal scratch']
  %s0 = inlined_call_operand.hbm [shape: f32[4,8,1024], index: 0, kind: input, shape index: {}]
  %s1 = inlined_call_operand.hbm [shape: f32[4,8,2,1024], index: 1, kind: output, shape index: {}]
  %s2 = sld [smem:[#allocation0]]
  $region41: #{tpu_custom_call.1} parent=0
    _
  %s4 = ssub.s32 1, %s2
  %s5 = scalar_select 0, %s4, %s2
  $region1: #{tpu_custom_call.1} parent=0
    #allocation2 [shape = 'u8[65536]{0}', space=vmem, size = 0x10000, scoped, tag = 'input window, operand 0']
    #allocation3 [shape = 's32[2]{0}', space=sflag, size = 0x8, scoped, tag = 'scoped memory for tpu_custom_call.1']
    #allocation4 [shape = 's32[2]{0}', space=sflag, size = 0x8, scoped, tag = 'scoped memory for tpu_custom_call.1']
    #allocation5 [shape = 'u8[131072]{0}', space=vmem, size = 0x20000, scoped, tag = 'output window, operand 0']
    %6 = vsyncpa [#allocation3], 0
    %s7 = scalar_lea.sflag [#allocation3], 1
    %8 = vsyncpa %s7, 0
    %9 = vsyncpa [#allocation4], 0
    %s10 = scalar_lea.sflag [#allocation4], 1
    %11 = vsyncpa %s10, 0
    loop: start=0, step=1, limit=6
    $region2: #{tpu_custom_call.1} parent=1 // loop_pre_header
      _
    $region3: #{tpu_custom_call.1} parent=1 // loop_header
      %s13 = sphi 0, %s17
      %p14 = scmp.ge.s32.totalorder %s13, 6
      %s20 = sphi 0, %s32
      %s21 = sphi 0, %s28
      %s22 = sphi 0, %s20
      %s23 = sphi 0, %s21
      %s24 = sphi 0, %s22
      %s25 = sphi 0, %s23
      %s35 = sphi 0, %s37
      %s38 = sphi 0, %s35
      %s39 = sphi 0, %s38
      %s55 = sphi 0, %s39
      %s63 = sphi 0, %s65
      %s66 = sphi 0, %s63
      %s67 = sphi 0, %s66
      %s83 = sphi 0, %s67
    $region4: #{tpu_custom_call.1} parent=1 // loop_header_branch
      %16 = sbr.rel (%p14) target = $region8
    $region5: #{tpu_custom_call.1} parent=1 // loop_body
      %s18 = ssub.s32 %s13, 1
      %s19 = ssub.s32 %s13, 2
      %s26 = sadd.s32 1, %s21
      %p27 = scmp.ge.s32.totalorder %s26, 1
      %s28 = scalar_select %p27, 0, %s26
      %s29 = sadd.s32 1, %s20
      %s30 = scalar_select %p27, %s29, %s20
      %p31 = scmp.ge.s32.totalorder %s30, 4
      %s32 = scalar_select %p31, 0, %s30
      %s33 = ssub.s32 %s20, %s32
      %p34 = scmp.eq.s32.totalorder %s33, 0
      %s36 = sadd.s32 %s35, 1
      %s37 = scalar_select %p34, %s35, %s36
      %p40 = pneg %p34
      %p41 = scmp.eq.s32.totalorder %s13, 3
      %p42 = por %p40, %p41
      %p43 = scmp.ne.s32.totalorder %s35, %s38
      %p44 = scmp.eq.s32.totalorder %s13, 0
      %p45 = por %p43, %p44
      %p46 = scmp.ne.s32.totalorder %s35, %s38
      %p47 = scmp.eq.s32.totalorder %s18, 3
      %p48 = por %p46, %p47
      %p49 = scmp.ne.s32.totalorder %s38, %s39
      %p50 = scmp.eq.s32.totalorder %s18, 0
      %p51 = por %p49, %p50
      %p52 = scmp.ne.s32.totalorder %s38, %s39
      %p53 = scmp.eq.s32.totalorder %s19, 3
      %p54 = por %p52, %p53
      %p56 = scmp.ne.s32.totalorder %s39, %s55
      %p57 = scmp.eq.s32.totalorder %s19, 0
      %p58 = por %p56, %p57
      %s59 = ssub.s32 %s20, %s32
      %s60 = ssub.s32 %s21, %s28
      %s61 = sor.u32 %s59, %s60
      %p62 = scmp.eq.s32.totalorder %s61, 0
      %s64 = sadd.s32 %s63, 1
      %s65 = scalar_select %p62, %s63, %s64
      %p68 = pneg %p62
      %p69 = scmp.eq.s32.totalorder %s13, 3
      %p70 = por %p68, %p69
      %p71 = scmp.ne.s32.totalorder %s63, %s66
      %p72 = scmp.eq.s32.totalorder %s13, 0
      %p73 = por %p71, %p72
      %p74 = scmp.ne.s32.totalorder %s63, %s66
      %p75 = scmp.eq.s32.totalorder %s18, 3
      %p76 = por %p74, %p75
      %p77 = scmp.ne.s32.totalorder %s66, %s67
      %p78 = scmp.eq.s32.totalorder %s18, 0
      %p79 = por %p77, %p78
      %p80 = scmp.ne.s32.totalorder %s66, %s67
      %p81 = scmp.eq.s32.totalorder %s19, 3
      %p82 = por %p80, %p81
      %p84 = scmp.ne.s32.totalorder %s67, %s83
      %p85 = scmp.eq.s32.totalorder %s19, 0
      %p86 = por %p84, %p85
      %p87 = scmp.le.s32.totalorder 1, %s13
      %p88 = scmp.lt.s32.totalorder %s13, 5
      %p89 = pnand %p87, %p88
      %p90 = pneg %p89
      // Predicated region
      $region9: #{tpu_custom_call.1} parent=5 // pred_check
        _
      $region10: #{tpu_custom_call.1} parent=5 // pred_check_branch
        %92 = sbr.rel (%p89) target = $region12
      $region11: #{tpu_custom_call.1} parent=5 // pred_region
        %s93 = ssub.s32 %s13, 1
      $region12: #{tpu_custom_call.1} parent=5 // pred_fallthru
        _
      %p94 = scmp.lt.s32.totalorder %s13, 4
      // Predicated region
      $region13: #{tpu_custom_call.1} parent=5 // pred_check
        %p95 = pneg %p94
      $region14: #{tpu_custom_call.1} parent=5 // pred_check_branch
        %97 = sbr.rel (%p95) target = $region16
      $region15: #{tpu_custom_call.1} parent=5 // pred_region
        // Predicated region
        $region17: #{tpu_custom_call.1} parent=15 // pred_check
          %p98 = pneg %p45
        $region18: #{tpu_custom_call.1} parent=15 // pred_check_branch
          %100 = sbr.rel (%p98) target = $region20
        $region19: #{tpu_custom_call.1} parent=15 // pred_region
          %s101 = sand.u32 %s35, 1
          %s102 = scalar_lea.sflag [#allocation3], %s101
          %s103 = sand.u32 %s35, 1
          %s104 = smul.addr %s103, 64
          %s105 = scalar_lea.vmem [#allocation2], %s104
          %s107 = ssub.s32 1024, 1024
          %108 = vsyncadd %s102, %s107
          %s109 = smul.addr %s20, 8
          %s110 = smul.addr %s109, 128
          %s111 = scalar_lea.hbm %s0, %s110
          %s113 = sshll.u32 %s105, 4
          %s114 = int_to_ptr.vmem [resolvable:$true] %s113
          %116 = dma.hbm_to_vmem [thread:$0]  %s111, 1024, %s114, %s102
        $region20: #{tpu_custom_call.1} parent=15 // pred_fallthru
          _
      $region16: #{tpu_custom_call.1} parent=5 // pred_fallthru
        _
      %p117 = scmp.le.s32.totalorder 1, %s13
      %p118 = scmp.lt.s32.totalorder %s13, 5
      %p119 = pnand %p117, %p118
      %p120 = pneg %p119
      // Predicated region
      $region21: #{tpu_custom_call.1} parent=5 // pred_check
        _
      $region22: #{tpu_custom_call.1} parent=5 // pred_check_branch
        %122 = sbr.rel (%p119) target = $region24
      $region23: #{tpu_custom_call.1} parent=5 // pred_region
        %s123 = ssub.s32 %s13, 1
        %s124 = sand.u32 %s38, 1
        %s125 = scalar_lea.sflag [#allocation3], %s124
        %s126 = sand.u32 %s38, 1
        %s127 = smul.addr %s126, 64
        %s128 = scalar_lea.vmem [#allocation2], %s127
        // Predicated region
        $region25: #{tpu_custom_call.1} parent=23 // pred_check
          %p129 = pneg %p51
        $region26: #{tpu_custom_call.1} parent=23 // pred_check_branch
          %131 = sbr.rel (%p129) target = $region28
        $region27: #{tpu_custom_call.1} parent=23 // pred_region
          %132 = dma.done %s125, 1024
        $region28: #{tpu_custom_call.1} parent=23 // pred_fallthru
          _
        %s133 = sand.u32 %s38, 1
        %s134 = scalar_lea.sflag [#allocation3], %s133
        %s135 = sand.u32 %s38, 1
        %s136 = smul.addr %s135, 64
        %s137 = scalar_lea.vmem [#allocation2], %s136
        %p138 = pneg %p51
        %p139 = pneg %p48
        %p140 = pneg %p79
        %p141 = pneg %p76
        %s142 = sand.u32 %s66, 1
        %s143 = scalar_lea.sflag [#allocation4], %s142
        %s144 = sand.u32 %s66, 1
        %s145 = smul.addr %s144, 128
        %s146 = scalar_lea.vmem [#allocation5], %s145
        %s147 = smul.u32 8, %s23
        %s148 = smul.u32 %s23, 8
        %s149 = sshra.s32 %s148, 3
        %s150 = sand.u32 %s148, 7
        %s151 = smul.u32 %s149, 8
        %s152 = smul.addr %s151, 8
        %s153 = scalar_lea.vmem %s128, %s152 [#allocation2]
        %v154 = vld [vmem:[%s153] sm:$0xff]
        %v155 = vld [vmem:[%s153 + $0x8] sm:$0xff]
        %v156 = vld [vmem:[%s153 + $0x10] sm:$0xff]
        %v157 = vld [vmem:[%s153 + $0x18] sm:$0xff]
        %v158 = vld [vmem:[%s153 + $0x20] sm:$0xff]
        %v159 = vld [vmem:[%s153 + $0x28] sm:$0xff]
        %v160 = vld [vmem:[%s153 + $0x30] sm:$0xff]
        %v161 = vld [vmem:[%s153 + $0x38] sm:$0xff]
        %v170 = vcombine.low %v154, %v155
        %v171 = vcombine.high %v154, %v155
        %v172 = vcombine.low %v156, %v157
        %v173 = vcombine.high %v156, %v157
        %v174 = vcombine.low %v158, %v159
        %v175 = vcombine.high %v158, %v159
        %v176 = vcombine.low %v160, %v161
        %v177 = vcombine.high %v160, %v161
        %v179 = vunpack.c.l.s4 1966171168
        %v180 = vunpack.c.0.s8 %v179
        %v181 = vlaneseq
        %v182 = vshrl.u32 %v181, 7
        %v183 = vsub.s32 %v180, %v182
        %v184 = vrot.slane %v170, %v183
        %v186 = vunpack.c.l.s4 1966171168
        %v187 = vunpack.c.0.s8 %v186
        %v188 = vlaneseq
        %v189 = vshrl.u32 %v188, 7
        %v190 = vsub.s32 %v187, %v189
        %v191 = vrot.slane %v171, %v190
        %v193 = vunpack.c.l.s4 1966171168
        %v194 = vunpack.c.0.s8 %v193
        %v195 = vlaneseq
        %v196 = vshrl.u32 %v195, 7
        %v197 = vsub.s32 %v194, %v196
        %v198 = vrot.slane %v172, %v197
        %v200 = vunpack.c.l.s4 1966171168
        %v201 = vunpack.c.0.s8 %v200
        %v202 = vlaneseq
        %v203 = vshrl.u32 %v202, 7
        %v204 = vsub.s32 %v201, %v203
        %v205 = vrot.slane %v173, %v204
        %v207 = vunpack.c.l.s4 1966171168
        %v208 = vunpack.c.0.s8 %v207
        %v209 = vlaneseq
        %v210 = vshrl.u32 %v209, 7
        %v211 = vsub.s32 %v208, %v210
        %v212 = vrot.slane %v174, %v211
        %v214 = vunpack.c.l.s4 1966171168
        %v215 = vunpack.c.0.s8 %v214
        %v216 = vlaneseq
        %v217 = vshrl.u32 %v216, 7
        %v218 = vsub.s32 %v215, %v217
        %v219 = vrot.slane %v175, %v218
        %v221 = vunpack.c.l.s4 1966171168
        %v222 = vunpack.c.0.s8 %v221
        %v223 = vlaneseq
        %v224 = vshrl.u32 %v223, 7
        %v225 = vsub.s32 %v222, %v224
        %v226 = vrot.slane %v176, %v225
        %v228 = vunpack.c.l.s4 1966171168
        %v229 = vunpack.c.0.s8 %v228
        %v230 = vlaneseq
        %v231 = vshrl.u32 %v230, 7
        %v232 = vsub.s32 %v229, %v231
        %v233 = vrot.slane %v177, %v232
        %v234 = vcombine.low %v184, %v198
        %v235 = vcombine.high %v184, %v198
        %v236 = vcombine.low %v191, %v205
        %v237 = vcombine.high %v191, %v205
        %v238 = vcombine.low %v212, %v226
        %v239 = vcombine.high %v212, %v226
        %v240 = vcombine.low %v219, %v233
        %v241 = vcombine.high %v219, %v233
        %v243 = vunpack.c.l.s4 1966171168
        %v244 = vunpack.c.0.s8 %v243
        %v245 = vlaneseq
        %v246 = vshrl.u32 %v245, 7
        %v247 = vsub.s32 %v244, %v246
        %v248 = vrot.slane %v234, %v247
        %v250 = vunpack.c.l.s4 1966171168
        %v251 = vunpack.c.0.s8 %v250
        %v252 = vlaneseq
        %v253 = vshrl.u32 %v252, 7
        %v254 = vsub.s32 %v251, %v253
        %v255 = vrot.slane %v236, %v254
        %v257 = vunpack.c.l.s4 1966171168
        %v258 = vunpack.c.0.s8 %v257
        %v259 = vlaneseq
        %v260 = vshrl.u32 %v259, 7
        %v261 = vsub.s32 %v258, %v260
        %v262 = vrot.slane %v235, %v261
        %v264 = vunpack.c.l.s4 1966171168
        %v265 = vunpack.c.0.s8 %v264
        %v266 = vlaneseq
        %v267 = vshrl.u32 %v266, 7
        %v268 = vsub.s32 %v265, %v267
        %v269 = vrot.slane %v237, %v268
        %v271 = vunpack.c.l.s4 1966171168
        %v272 = vunpack.c.0.s8 %v271
        %v273 = vlaneseq
        %v274 = vshrl.u32 %v273, 7
        %v275 = vsub.s32 %v272, %v274
        %v276 = vrot.slane %v238, %v275
        %v278 = vunpack.c.l.s4 1966171168
        %v279 = vunpack.c.0.s8 %v278
        %v280 = vlaneseq
        %v281 = vshrl.u32 %v280, 7
        %v282 = vsub.s32 %v279, %v281
        %v283 = vrot.slane %v240, %v282
        %v285 = vunpack.c.l.s4 1966171168
        %v286 = vunpack.c.0.s8 %v285
        %v287 = vlaneseq
        %v288 = vshrl.u32 %v287, 7
        %v289 = vsub.s32 %v286, %v288
        %v290 = vrot.slane %v239, %v289
        %v292 = vunpack.c.l.s4 1966171168
        %v293 = vunpack.c.0.s8 %v292
        %v294 = vlaneseq
        %v295 = vshrl.u32 %v294, 7
        %v296 = vsub.s32 %v293, %v295
        %v297 = vrot.slane %v241, %v296
        %v298 = vcombine.low %v248, %v276
        %v299 = vcombine.high %v248, %v276
        %v300 = vcombine.low %v255, %v283
        %v301 = vcombine.high %v255, %v283
        %v302 = vcombine.low %v262, %v290
        %v303 = vcombine.high %v262, %v290
        %v304 = vcombine.low %v269, %v297
        %v305 = vcombine.high %v269, %v297
        %314 = vst [vmem:[%s146] ss:$2 sm:$0xff] %v298
        %s315 = scalar_lea.vmem %s146, 16 [#allocation5]
        %316 = vst [vmem:[%s315] ss:$2 sm:$0xff] %v302
        %s317 = scalar_lea.vmem %s146, 32 [#allocation5]
        %318 = vst [vmem:[%s317] ss:$2 sm:$0xff] %v299
        %s319 = scalar_lea.vmem %s146, 48 [#allocation5]
        %320 = vst [vmem:[%s319] ss:$2 sm:$0xff] %v303
        %s321 = scalar_lea.vmem %s146, 64 [#allocation5]
        %322 = vst [vmem:[%s321] ss:$2 sm:$0xff] %v300
        %s323 = scalar_lea.vmem %s146, 80 [#allocation5]
        %324 = vst [vmem:[%s323] ss:$2 sm:$0xff] %v304
        %s325 = scalar_lea.vmem %s146, 96 [#allocation5]
        %326 = vst [vmem:[%s325] ss:$2 sm:$0xff] %v301
        %s327 = scalar_lea.vmem %s146, 112 [#allocation5]
        %328 = vst [vmem:[%s327] ss:$2 sm:$0xff] %v305
        %s329 = scalar_lea.vmem %s146, 1 [#allocation5]
        %330 = vst [vmem:[%s329] ss:$2 sm:$0xff] %v298
        %s331 = scalar_lea.vmem %s146, 17 [#allocation5]
        %332 = vst [vmem:[%s331] ss:$2 sm:$0xff] %v302
        %s333 = scalar_lea.vmem %s146, 33 [#allocation5]
        %334 = vst [vmem:[%s333] ss:$2 sm:$0xff] %v299
        %s335 = scalar_lea.vmem %s146, 49 [#allocation5]
        %336 = vst [vmem:[%s335] ss:$2 sm:$0xff] %v303
        %s337 = scalar_lea.vmem %s146, 65 [#allocation5]
        %338 = vst [vmem:[%s337] ss:$2 sm:$0xff] %v300
        %s339 = scalar_lea.vmem %s146, 81 [#allocation5]
        %340 = vst [vmem:[%s339] ss:$2 sm:$0xff] %v304
        %s341 = scalar_lea.vmem %s146, 97 [#allocation5]
        %342 = vst [vmem:[%s341] ss:$2 sm:$0xff] %v301
        %s343 = scalar_lea.vmem %s146, 113 [#allocation5]
        %344 = vst [vmem:[%s343] ss:$2 sm:$0xff] %v305
        %s345 = sand.u32 %s66, 1
        %s346 = scalar_lea.sflag [#allocation4], %s345
        %s347 = sand.u32 %s66, 1
        %s348 = smul.addr %s347, 128
        %s349 = scalar_lea.vmem [#allocation5], %s348
        // Predicated region
        $region29: #{tpu_custom_call.1} parent=23 // pred_check
          %p350 = pneg %p76
        $region30: #{tpu_custom_call.1} parent=23 // pred_check_branch
          %352 = sbr.rel (%p350) target = $region32
        $region31: #{tpu_custom_call.1} parent=23 // pred_region
          %s353 = smul.u32 8, %s23
          %s355 = ssub.s32 2048, 2048
          %356 = vsyncadd %s346, %s355
          %s357 = smul.addr %s353, 8
          %s358 = smul.addr %s22, 64
          %s359 = sadd.s32 %s357, %s358
          %s360 = smul.addr %s359, 32
          %s361 = scalar_lea.hbm %s1, %s360
          %s362 = sshll.u32 %s349, 4
          %s363 = int_to_ptr.vmem [resolvable:$true] %s362
          %368 = dma.vmem_to_hbm [thread:$0]  %s363, 2048, %s361, %s346, 256, 256, 16
        $region32: #{tpu_custom_call.1} parent=23 // pred_fallthru
          _
      $region24: #{tpu_custom_call.1} parent=5 // pred_fallthru
        _
      %p369 = scmp.le.s32.totalorder 2, %s13
      // Predicated region
      $region33: #{tpu_custom_call.1} parent=5 // pred_check
        %p370 = pneg %p369
      $region34: #{tpu_custom_call.1} parent=5 // pred_check_branch
        %372 = sbr.rel (%p370) target = $region36
      $region35: #{tpu_custom_call.1} parent=5 // pred_region
        %s373 = ssub.s32 %s13, 2
        // Predicated region
        $region37: #{tpu_custom_call.1} parent=35 // pred_check
          %p374 = pneg %p82
        $region38: #{tpu_custom_call.1} parent=35 // pred_check_branch
          %376 = sbr.rel (%p374) target = $region40
        $region39: #{tpu_custom_call.1} parent=35 // pred_region
          %s377 = sand.u32 %s67, 1
          %s378 = scalar_lea.sflag [#allocation4], %s377
          %s379 = sand.u32 %s67, 1
          %s380 = smul.addr %s379, 128
          %s381 = scalar_lea.vmem [#allocation5], %s380
          %382 = dma.done %s378, 2048
        $region40: #{tpu_custom_call.1} parent=35 // pred_fallthru
          _
      $region36: #{tpu_custom_call.1} parent=5 // pred_fallthru
        _
    $region6: #{tpu_custom_call.1} parent=1 // loop_footer
      %s17 = sadd.s32 1, %s13
    $region7: #{tpu_custom_call.1} parent=1 // loop_footer_branch
      %12 = sbr.rel target = $region3
    $region8: #{tpu_custom_call.1} parent=1 // loop_exit
      _
    %383 = vsyncpa [#allocation3], 1
    %s384 = scalar_lea.sflag [#allocation3], 1
    %385 = vsyncpa %s384, 1
    %386 = vsyncpa [#allocation4], 1
    %s387 = scalar_lea.sflag [#allocation4], 1
    %388 = vsyncpa %s387, 1

</llo_original>
